<compile_context>
chip_gen: v7x
topology: tpu7x:2x2x1
jax: 0.10.0
libtpu: 0.0.40
codegen_flags: <defaults>
</compile_context>

<pallas_src>
import functools
import math

import jax
import jax.numpy as jnp
from jax.experimental import pallas as pl
from jax.experimental.pallas import tpu as pltpu


# ----------------------------- tiling helpers -------------------------------

# 48 MiB: fits under v7x's 64 MiB physical VMEM with headroom, and is well
# above the scoped defaults on v5e/v6e so it never binds tile choice there.
_VMEM_LIMIT = 48 * 1024 * 1024


def _round_up(x, m):
    return ((x + m - 1) // m) * m


def _pick_tile(dim, target, align):
    """Largest tile <= target that is a multiple of `align` and divides `dim`."""
    if dim <= target:
        return dim
    t = (target // align) * align
    while t >= align:
        if dim % t == 0:
            return t
        t -= align
    # TODO(synk): no aligned divisor -> full dim.  Weight/seq dims in BERT
    # configs always divide cleanly; token counts are handled by padding below.
    return dim


# ----------------------------- Pallas kernels -------------------------------

def _linear_kernel(x_ref, w_ref, b_ref, o_ref, acc_ref, *, activation):
    """Tiled o = activation(x @ w + b); f32 accumulation across the K grid axis."""
    @pl.when(pl.program_id(2) == 0)
    def _init():
        acc_ref[...] = jnp.zeros_like(acc_ref)

    acc_ref[...] += jnp.dot(x_ref[...], w_ref[...],
                            preferred_element_type=jnp.float32)

    @pl.when(pl.program_id(2) == pl.num_programs(2) - 1)
    def _finalize():
        y = acc_ref[...] + b_ref[...].astype(jnp.float32)
        if activation == "gelu":
            # TODO(synk): HF BERT uses exact (erf) GELU; tanh approximation used
            # here because it lowers to Mosaic-supported elementwise ops only.
            c = math.sqrt(2.0 / math.pi)
            y = 0.5 * y * (1.0 + jnp.tanh(c * (y + 0.044715 * y * y * y)))
        elif activation == "tanh":
            y = jnp.tanh(y)
        o_ref[...] = y.astype(o_ref.dtype)


def linear(x, w, b, activation=None, out_dtype=None,
           tm_target=1024, tn_target=256, tk_target=512):
    """activation(x @ w + b).  x:(M,K) bf16, w:(K,N) bf16, b:(N,) f32.

    Large tm cuts weight HBM re-reads (traffic ~ K*N*(M/tm)) and grid-step
    overhead; awkward M (= B*S) is zero-padded to a tile multiple rather than
    falling back to one giant block."""
    M, K = x.shape
    K2, N = w.shape
    assert K == K2
    out_dtype = out_dtype or x.dtype
    tn = _pick_tile(N, tn_target, 128)
    tk = _pick_tile(K, tk_target, 128)
    tm = min(tm_target, _round_up(M, 8))
    Mp = _round_up(M, tm)
    xp = x if Mp == M else jnp.pad(x, ((0, Mp - M), (0, 0)))
    grid = (Mp // tm, N // tn, K // tk)
    out = pl.pallas_call(
        functools.partial(_linear_kernel, activation=activation),
        out_shape=jax.ShapeDtypeStruct((Mp, N), out_dtype),
        grid=grid,
        in_specs=[pl.BlockSpec((tm, tk), lambda i, j, k: (i, k)),
                  pl.BlockSpec((tk, tn), lambda i, j, k: (k, j)),
                  pl.BlockSpec((1, tn), lambda i, j, k: (0, j))],
        out_specs=pl.BlockSpec((tm, tn), lambda i, j, k: (i, j)),
        scratch_shapes=[pltpu.VMEM((tm, tn), jnp.float32)],
        compiler_params=pltpu.CompilerParams(
            dimension_semantics=("parallel", "parallel", "arbitrary"),
            vmem_limit_bytes=_VMEM_LIMIT),
    )(xp, w, b.reshape(1, N))
    return out if Mp == M else out[:M]


def _ln_kernel(x_ref, g_ref, b_ref, o_ref, *, eps):
    x = x_ref[...].astype(jnp.float32)
    mean = jnp.mean(x, axis=-1, keepdims=True)
    var = jnp.mean((x - mean) ** 2, axis=-1, keepdims=True)
    y = (x - mean) * jax.lax.rsqrt(var + eps)
    o_ref[...] = (y * g_ref[...] + b_ref[...]).astype(o_ref.dtype)


def _ln_res_kernel(x_ref, r_ref, g_ref, b_ref, o_ref, *, eps):
    # Fused residual add: LN(x + residual) in one pass (no extra HBM round-trip).
    x = x_ref[...].astype(jnp.float32) + r_ref[...].astype(jnp.float32)
    mean = jnp.mean(x, axis=-1, keepdims=True)
    var = jnp.mean((x - mean) ** 2, axis=-1, keepdims=True)
    y = (x - mean) * jax.lax.rsqrt(var + eps)
    o_ref[...] = (y * g_ref[...] + b_ref[...]).astype(o_ref.dtype)


def layer_norm(x, g, b, residual=None, eps=1e-12, out_dtype=None,
               tm_target=1024):
    M, H = x.shape
    out_dtype = out_dtype or x.dtype
    tm = min(tm_target, _round_up(M, 8))
    Mp = _round_up(M, tm)
    if Mp != M:
        x = jnp.pad(x, ((0, Mp - M), (0, 0)))
        if residual is not None:
            residual = jnp.pad(residual, ((0, Mp - M), (0, 0)))
    grid = (Mp // tm,)
    row_spec = pl.BlockSpec((tm, H), lambda i: (i, 0))
    vec_spec = pl.BlockSpec((1, H), lambda i: (0, 0))
    if residual is None:
        kern, operands = _ln_kernel, (x,)
        in_specs = [row_spec, vec_spec, vec_spec]
    else:
        kern, operands = _ln_res_kernel, (x, residual)
        in_specs = [row_spec, row_spec, vec_spec, vec_spec]
    out = pl.pallas_call(
        functools.partial(kern, eps=eps),
        out_shape=jax.ShapeDtypeStruct((Mp, H), out_dtype),
        grid=grid,
        in_specs=in_specs,
        out_specs=row_spec,
        compiler_params=pltpu.CompilerParams(
            dimension_semantics=("parallel",),
            vmem_limit_bytes=_VMEM_LIMIT),
    )(*operands, g.reshape(1, H), b.reshape(1, H))
    return out if Mp == M else out[:M]


def _flash_attn_kernel(q_ref, k_ref, v_ref, mask_ref, o_ref,
                       m_sc, l_sc, acc_sc, *, scale):
    """Flash-style attention: online softmax over kv blocks, all heads at once.

    Q/K/V blocks arrive token-major (t, nh, hd) straight out of the fused-QKV
    matmul layout; the head-major swap happens in-kernel (XLU, overlapped with
    MXU) instead of as an XLA transpose HBM round-trip."""
    ki = pl.program_id(2)

    @pl.when(ki == 0)
    def _init():
        m_sc[...] = jnp.full_like(m_sc, -jnp.inf)
        l_sc[...] = jnp.zeros_like(l_sc)
        acc_sc[...] = jnp.zeros_like(acc_sc)

    q = pltpu.einshape("qhd->hqd", q_ref[0, :, 0, :, :])   # (nh, tq, hd)
    k = pltpu.einshape("khd->hkd", k_ref[0, :, 0, :, :])   # (nh, tk, hd)
    v = pltpu.einshape("khd->hkd", v_ref[0, :, 0, :, :])   # (nh, tk, hd)

    s = jnp.einsum("hqd,hkd->hqk", q, k,
                   preferred_element_type=jnp.float32) * scale
    s = s + mask_ref[...]                                  # (1,1,tk) additive mask

    m_prev = m_sc[...]                                     # (nh, tq, 1)
    m_new = jnp.maximum(m_prev, jnp.max(s, axis=-1, keepdims=True))
    alpha = jnp.exp(m_prev - m_new)
    p = jnp.exp(s - m_new)                                 # (nh, tq, tk)
    l_sc[...] = alpha * l_sc[...] + jnp.sum(p, axis=-1, keepdims=True)
    acc_sc[...] = alpha * acc_sc[...] + jnp.einsum(
        "hqk,hkd->hqd", p.astype(v.dtype), v,
        preferred_element_type=jnp.float32)
    m_sc[...] = m_new

    @pl.when(ki == pl.num_programs(2) - 1)
    def _finalize():
        out = acc_sc[...] * pl.reciprocal(l_sc[...], approx=True)   # (nh, tq, hd)
        # Write back token-major so the wrapper reshape (B,S,nh,hd)->(B*S,H) is free.
        o_ref[0] = pltpu.einshape("hqd->qhd", out).astype(o_ref.dtype)


def attention(qkv, mask_add):
    """qkv: (B, S, 3, nh, hd) from the fused QKV projection (free reshape of
    (B*S, 3H)); mask_add: (B, 1, S) additive padding mask.  Returns (B, S, nh, hd)."""
    B, S, three, nh, hd = qkv.shape
    assert three == 3
    scale = 1.0 / math.sqrt(hd)
    tq = _pick_tile(S, 256, 8)
    tk = _pick_tile(S, 512, 128)
    grid = (B, S // tq, S // tk)   # (batch, q-blocks) parallel, kv reduction last
    return pl.pallas_call(
        functools.partial(_flash_attn_kernel, scale=scale),
        out_shape=jax.ShapeDtypeStruct((B, S, nh, hd), qkv.dtype),
        grid=grid,
        in_specs=[
            pl.BlockSpec((1, tq, 1, nh, hd), lambda b, qi, ki: (b, qi, 0, 0, 0)),
            pl.BlockSpec((1, tk, 1, nh, hd), lambda b, qi, ki: (b, ki, 1, 0, 0)),
            pl.BlockSpec((1, tk, 1, nh, hd), lambda b, qi, ki: (b, ki, 2, 0, 0)),
            pl.BlockSpec((1, 1, tk), lambda b, qi, ki: (b, 0, ki)),
        ],
        out_specs=pl.BlockSpec((1, tq, nh, hd), lambda b, qi, ki: (b, qi, 0, 0)),
        scratch_shapes=[
            pltpu.VMEM((nh, tq, 1), jnp.float32),    # running max m
            pltpu.VMEM((nh, tq, 1), jnp.float32),    # running sum l
            pltpu.VMEM((nh, tq, hd), jnp.float32),   # context accumulator
        ],
        compiler_params=pltpu.CompilerParams(
            dimension_semantics=("parallel", "parallel", "arbitrary"),
            vmem_limit_bytes=_VMEM_LIMIT),
    )(qkv, qkv, qkv, mask_add)


def _head_kernel(cls_ref, wp_ref, bp_ref, wc_ref, bc_ref, o_ref):
    """Fused BERT pooler (tanh) + classifier head; lane-dense padded output."""
    pooled = jnp.dot(cls_ref[...], wp_ref[...],
                     preferred_element_type=jnp.float32)
    pooled = jnp.tanh(pooled + bp_ref[...])
    logits = jnp.dot(pooled.astype(wc_ref.dtype), wc_ref[...],
                     preferred_element_type=jnp.float32)
    o_ref[...] = (logits + bc_ref[...]).astype(o_ref.dtype)


def pooler_classifier_head(cls, wp, bp, wc_pad, bc_pad, n_classes):
    B, H = cls.shape
    n_pad = wc_pad.shape[1]
    out = pl.pallas_call(
        _head_kernel,
        out_shape=jax.ShapeDtypeStruct((B, n_pad), jnp.float32),
        in_specs=[pl.BlockSpec(memory_space=pltpu.VMEM)] * 5,
        out_specs=pl.BlockSpec(memory_space=pltpu.VMEM),
    )(cls, wp, bp.reshape(1, H), wc_pad, bc_pad)
    return out[:, :n_classes]


# ------------------------------ Model (glue) ---------------------------------

def init_params(key, cfg):
    H, I = cfg["hidden"], cfg["intermediate"]
    n_classes = cfg["n_classes"]
    wdt = jnp.bfloat16   # MXU inputs in bf16; biases / LN params stay f32

    def dense(k, din, dout):
        w = (jax.random.normal(k, (din, dout), jnp.float32) * 0.02).astype(wdt)
        return {"w": w, "b": jnp.zeros((dout,), jnp.float32)}

    keys = jax.random.split(key, 6 + cfg["layers"])
    # Classifier weight padded to a 128-lane slab ONCE here (not per forward).
    n_pad = _round_up(n_classes, 128)
    wc = (jax.random.normal(keys[4], (H, n_classes), jnp.float32) * 0.02).astype(wdt)
    wc_pad = jnp.zeros((H, n_pad), wdt).at[:, :n_classes].set(wc)
    bc_pad = jnp.zeros((1, n_pad), jnp.float32)

    params = {
        "word_emb": jax.random.normal(keys[0], (cfg["vocab"], H), jnp.float32) * 0.02,
        "pos_emb": jax.random.normal(keys[1], (cfg["max_pos"], H), jnp.float32) * 0.02,
        "type_emb": jax.random.normal(keys[2], (2, H), jnp.float32) * 0.02,
        "emb_ln_g": jnp.ones((H,), jnp.float32),
        "emb_ln_b": jnp.zeros((H,), jnp.float32),
        "pooler": dense(keys[3], H, H),
        "classifier": {"w": wc_pad, "b": bc_pad},
        "layers": [],
    }
    for i in range(cfg["layers"]):
        lk = jax.random.split(keys[5 + i], 4)
        params["layers"].append({
            "qkv": dense(lk[0], H, 3 * H),   # fused W_q | W_k | W_v
            "o": dense(lk[1], H, H),
            "ln1_g": jnp.ones((H,), jnp.float32),
            "ln1_b": jnp.zeros((H,), jnp.float32),
            "ffn_in": dense(lk[2], H, I),
            "ffn_out": dense(lk[3], I, H),
            "ln2_g": jnp.ones((H,), jnp.float32),
            "ln2_b": jnp.zeros((H,), jnp.float32),
        })
    return params


def sentiment_classifier_forward(params, input_ids, attention_mask, cfg):
    B, S = input_ids.shape
    H, nh = cfg["hidden"], cfg["heads"]
    hd = H // nh
    act_dt = jnp.bfloat16

    # --- BERT embeddings (gathers are plain-JAX glue; LN is a Pallas kernel) ---
    pos_ids = jnp.arange(S)
    emb = (params["word_emb"][input_ids]
           + params["pos_emb"][pos_ids][None, :, :]
           + params["type_emb"][0][None, None, :])          # token_type_ids == 0
    h = layer_norm(emb.reshape(B * S, H), params["emb_ln_g"],
                   params["emb_ln_b"], out_dtype=act_dt)
    # embedding dropout: identity in inference mode

    # additive attention mask, HF-style: (1 - mask) * -10000
    mask_add = ((1.0 - attention_mask.astype(jnp.float32)) * -10000.0
                ).reshape(B, 1, S)

    # --- BERT encoder layers ---
    for lyr in params["layers"]:
        # Fused QKV projection: one matmul / one read of h per layer.
        qkv = linear(h, lyr["qkv"]["w"], lyr["qkv"]["b"])     # (B*S, 3H) bf16
        # Free reshape; the attention BlockSpecs select the q/k/v slice and the
        # kernel does the head-major swap in VMEM (no XLA transpose round trips).
        ctx = attention(qkv.reshape(B, S, 3, nh, hd), mask_add)   # (B, S, nh, hd)
        ctx = ctx.reshape(B * S, H)                           # free reshape

        attn_out = linear(ctx, lyr["o"]["w"], lyr["o"]["b"])
        # attention-output dropout: identity in inference mode
        h = layer_norm(attn_out, lyr["ln1_g"], lyr["ln1_b"],
                       residual=h, out_dtype=act_dt)

        ffn = linear(h, lyr["ffn_in"]["w"], lyr["ffn_in"]["b"],
                     activation="gelu")
        ffn = linear(ffn, lyr["ffn_out"]["w"], lyr["ffn_out"]["b"])
        # FFN dropout: identity in inference mode
        h = layer_norm(ffn, lyr["ln2_g"], lyr["ln2_b"],
                       residual=h, out_dtype=act_dt)

    # --- BERT pooler + SentimentClassifier head (fused, dropout = identity) ---
    cls = h.reshape(B, S, H)[:, 0, :]
    logits = pooler_classifier_head(
        cls, params["pooler"]["w"], params["pooler"]["b"],
        params["classifier"]["w"], params["classifier"]["b"],
        cfg["n_classes"])
    return logits


# ---------------------------------- main -------------------------------------

if __name__ == "__main__":
    cfg = dict(vocab=128, max_pos=32, hidden=32, heads=4,
               intermediate=64, layers=2, n_classes=3)

    key = jax.random.PRNGKey(0)
    k_params, k_ids = jax.random.split(key)

    params = init_params(k_params, cfg)

    B, S = 2, 8
    input_ids = jax.random.randint(k_ids, (B, S), 0, cfg["vocab"], dtype=jnp.int32)
    attention_mask = jnp.array([[1, 1, 1, 1, 1, 1, 1, 1],
                                [1, 1, 1, 1, 1, 0, 0, 0]], dtype=jnp.int32)

    logits = sentiment_classifier_forward(params, input_ids, attention_mask, cfg)
    jax.block_until_ready(logits)
    assert logits.shape == (B, cfg["n_classes"])
    print("KERNEL_OK")
</pallas_src>

<mosaic_0001>
module attributes {stable_mosaic.version = 11 : i64} {
  func.func @_ln_kernel(%arg0: i32, %arg1: memref<16x32xf32, #tpu.memory_space<vmem>>, %arg2: memref<1x32xf32, #tpu.memory_space<vmem>>, %arg3: memref<1x32xf32, #tpu.memory_space<vmem>>, %arg4: memref<16x32xbf16, #tpu.memory_space<vmem>>) attributes {dimension_semantics = [#tpu.dimension_semantics<parallel>], iteration_bounds = array<i64: 1>, scalar_prefetch = 0 : i64, scratch_operands = 0 : i64, tpu.core_type = #tpu.core_type<tc>, window_params = [{transform_indices = @transform_0, window_bounds = array<i64: 16, 32>}, {pipeline_mode = #tpu.pipeline_mode<synchronous>, transform_indices = @transform_1, window_bounds = array<i64: 1, 32>}, {pipeline_mode = #tpu.pipeline_mode<synchronous>, transform_indices = @transform_2, window_bounds = array<i64: 1, 32>}, {transform_indices = @transform_3, window_bounds = array<i64: 16, 32>}]} {
    %c0 = arith.constant 0 : index
    %c0_0 = arith.constant 0 : index
    %0 = vector.load %arg1[%c0, %c0_0] : memref<16x32xf32, #tpu.memory_space<vmem>>, vector<16x32xf32>
    %cst = arith.constant dense<0.000000e+00> : vector<16xf32>
    %1 = vector.multi_reduction <add>, %0, %cst [1] : vector<16x32xf32> to vector<16xf32>
    %2 = vector.shape_cast %1 : vector<16xf32> to vector<16x1xf32>
    %cst_1 = arith.constant 3.200000e+01 : f32
    %3 = vector.broadcast %cst_1 : f32 to vector<16x1xf32>
    %4 = arith.divf %2, %3 : vector<16x1xf32>
    %5 = vector.broadcast %4 : vector<16x1xf32> to vector<16x32xf32>
    %6 = arith.subf %0, %5 : vector<16x32xf32>
    %7 = arith.mulf %6, %6 : vector<16x32xf32>
    %cst_2 = arith.constant dense<0.000000e+00> : vector<16xf32>
    %8 = vector.multi_reduction <add>, %7, %cst_2 [1] : vector<16x32xf32> to vector<16xf32>
    %9 = vector.shape_cast %8 : vector<16xf32> to vector<16x1xf32>
    %cst_3 = arith.constant 3.200000e+01 : f32
    %10 = vector.broadcast %cst_3 : f32 to vector<16x1xf32>
    %11 = arith.divf %9, %10 : vector<16x1xf32>
    %12 = vector.broadcast %4 : vector<16x1xf32> to vector<16x32xf32>
    %13 = arith.subf %0, %12 : vector<16x32xf32>
    %cst_4 = arith.constant 9.99999996E-13 : f32
    %14 = vector.broadcast %cst_4 : f32 to vector<16x1xf32>
    %15 = arith.addf %11, %14 : vector<16x1xf32>
    %16 = math.rsqrt %15 : vector<16x1xf32>
    %17 = vector.broadcast %16 : vector<16x1xf32> to vector<16x32xf32>
    %18 = arith.mulf %13, %17 : vector<16x32xf32>
    %c0_5 = arith.constant 0 : index
    %c0_6 = arith.constant 0 : index
    %19 = vector.load %arg2[%c0_5, %c0_6] : memref<1x32xf32, #tpu.memory_space<vmem>>, vector<1x32xf32>
    %20 = vector.broadcast %19 : vector<1x32xf32> to vector<16x32xf32>
    %21 = arith.mulf %18, %20 : vector<16x32xf32>
    %c0_7 = arith.constant 0 : index
    %c0_8 = arith.constant 0 : index
    %22 = vector.load %arg3[%c0_7, %c0_8] : memref<1x32xf32, #tpu.memory_space<vmem>>, vector<1x32xf32>
    %23 = vector.broadcast %22 : vector<1x32xf32> to vector<16x32xf32>
    %24 = arith.addf %21, %23 : vector<16x32xf32>
    %25 = arith.truncf %24 : vector<16x32xf32> to vector<16x32xbf16>
    %c0_9 = arith.constant 0 : index
    %c0_10 = arith.constant 0 : index
    %26 = vector.load %arg4[%c0_9, %c0_10] : memref<16x32xbf16, #tpu.memory_space<vmem>>, vector<16x32xbf16>
    tpu.vector_store %arg4[%c0_9, %c0_10], %25 {strides = array<i32>} : memref<16x32xbf16, #tpu.memory_space<vmem>>, vector<16x32xbf16>,
    return
  }
  func.func @transform_0(%arg0: i32) -> (i32, i32) {
    %c0_i32 = arith.constant 0 : i32
    %c0_i32_0 = arith.constant 0 : i32
    return %arg0, %c0_i32 : i32, i32
  }
  func.func @transform_1(%arg0: i32) -> (i32, i32) {
    %c0_i32 = arith.constant 0 : i32
    %c0_i32_0 = arith.constant 0 : i32
    %c0_i32_1 = arith.constant 0 : i32
    return %c0_i32, %c0_i32_0 : i32, i32
  }
  func.func @transform_2(%arg0: i32) -> (i32, i32) {
    %c0_i32 = arith.constant 0 : i32
    %c0_i32_0 = arith.constant 0 : i32
    %c0_i32_1 = arith.constant 0 : i32
    return %c0_i32, %c0_i32_0 : i32, i32
  }
  func.func @transform_3(%arg0: i32) -> (i32, i32) {
    %c0_i32 = arith.constant 0 : i32
    %c0_i32_0 = arith.constant 0 : i32
    return %arg0, %c0_i32 : i32, i32
  }
}

</mosaic_0001>

<llo_original>
// kernel: tpu_custom_call.1
$region0: #{tpu_custom_call.1}
  #allocation0 [shape = 'u32[]', space=smem, size = 0x4, offset = 0x4, fixed_abs, tag = 'smem constant byte address 0x4 - core index']
  #allocation1 [shape = 'u32[144,128]{1,0:T(1,128)}', space=vmem, size = 0x12000, scoped, tag = 'internal scratch']
  %s0 = inlined_call_operand.hbm [shape: f32[16,32], index: 0, kind: input, shape index: {}]
  %s1 = inlined_call_operand.vmem [shape: f32[1,32], index: 1, kind: input, shape index: {}]
  %s2 = inlined_call_operand.vmem [shape: f32[1,32], index: 2, kind: input, shape index: {}]
  %s3 = inlined_call_operand.hbm [shape: bf16[16,32], index: 3, kind: output, shape index: {}]
  %s4 = sld [smem:[#allocation0]]
  $region26: #{tpu_custom_call.1} parent=0
    _
  %s6 = ssub.s32 1, %s4
  %s7 = scalar_select 0, %s6, %s4
  $region1: #{tpu_custom_call.1} parent=0
    #allocation2 [shape = 'u8[8192]{0}', space=vmem, size = 0x2000, scoped, tag = 'input window, operand 0, single buffered']
    #allocation3 [shape = 's32[1]{0}', space=sflag, size = 0x4, scoped, tag = 'scoped memory for tpu_custom_call.1']
    #allocation4 [shape = 's32[1]{0}', space=sflag, size = 0x4, scoped, tag = 'scoped memory for tpu_custom_call.1']
    #allocation5 [shape = 'u8[4096]{0}', space=vmem, size = 0x1000, scoped, tag = 'output window, operand 0, single buffered']
    %8 = vsyncpa [#allocation3], 0
    %9 = vsyncpa [#allocation4], 0
    // Predicated region
    $region2: #{tpu_custom_call.1} parent=1 // pred_check
      _
    $region3: #{tpu_custom_call.1} parent=1 // pred_check_branch
      %11 = sbr.rel (0) target = $region5
    $region4: #{tpu_custom_call.1} parent=1 // pred_region
      %s13 = ssub.s32 256, 256
      %14 = vsyncadd [#allocation3], %s13
      %s15 = sshll.u32 [#allocation2], 4
      %s16 = int_to_ptr.vmem [resolvable:$true] %s15
      %21 = dma.hbm_to_vmem [thread:$0]  %s0, 256, %s16, [#allocation3], 128, 128, 8
    $region5: #{tpu_custom_call.1} parent=1 // pred_fallthru
      _
    // Predicated region
    $region6: #{tpu_custom_call.1} parent=1 // pred_check
      _
    $region7: #{tpu_custom_call.1} parent=1 // pred_check_branch
      %23 = sbr.rel (0) target = $region9
    $region8: #{tpu_custom_call.1} parent=1 // pred_region
      _
    $region9: #{tpu_custom_call.1} parent=1 // pred_fallthru
      _
    // Predicated region
    $region10: #{tpu_custom_call.1} parent=1 // pred_check
      _
    $region11: #{tpu_custom_call.1} parent=1 // pred_check_branch
      %25 = sbr.rel (0) target = $region13
    $region12: #{tpu_custom_call.1} parent=1 // pred_region
      _
    $region13: #{tpu_custom_call.1} parent=1 // pred_fallthru
      _
    // Predicated region
    $region14: #{tpu_custom_call.1} parent=1 // pred_check
      _
    $region15: #{tpu_custom_call.1} parent=1 // pred_check_branch
      %27 = sbr.rel (0) target = $region17
    $region16: #{tpu_custom_call.1} parent=1 // pred_region
      %28 = dma.done [#allocation3], 256
    $region17: #{tpu_custom_call.1} parent=1 // pred_fallthru
      _
    %v29 = vld [vmem:[#allocation2] sm:$0xff]
    %v30 = vld [vmem:[#allocation2 + $0x8] sm:$0xff]
    %vm31 = vcmask 261120
    %v32 = vsel %vm31, %v29, 0.0
    %33 = vadd.xlane.f32.xlu0 %v32
    %v34 = vpop.xlane.xlu0 %33
    %v35 = vsel %vm31, %v30, 0.0
    %36 = vadd.xlane.f32.xlu0 %v35
    %v37 = vpop.xlane.xlu0 %36
    %v38 = vrcp.pop 32.0
    %v39 = vmul.f32 %v34, %v38
    %v40 = vmul.f32 %v37, %v38
    %v41 = vsub.f32 %v29, %v39
    %v42 = vsub.f32 %v30, %v40
    %v43 = vmul.f32 %v41, %v41
    %v44 = vmul.f32 %v42, %v42
    %v45 = vsel %vm31, %v43, 0.0
    %46 = vadd.xlane.f32.xlu0 %v45
    %v47 = vpop.xlane.xlu0 %46
    %v48 = vsel %vm31, %v44, 0.0
    %49 = vadd.xlane.f32.xlu0 %v48
    %v50 = vpop.xlane.xlu0 %49
    %v51 = vmul.f32 %v47, %v38
    %v52 = vmul.f32 %v50, %v38
    %v53 = vadd.f32 %v51, 1e-12
    %v54 = vadd.f32 %v52, 1e-12
    %v55 = vrsqrt.pop %v53
    %v56 = vrsqrt.pop %v54
    %v57 = vmul.f32 %v41, %v55
    %v58 = vmul.f32 %v42, %v56
    %v59 = vld [vmem:[%s1] sm:$0x1]
    %v61 = vlaneseq
    %v62 = vshrl.u32 %v61, 7
    %v63 = vsub.s32 0, %v62
    %v64 = vrot.slane %v59, %v63
    %v66 = vmul.f32 %v57, %v64
    %v67 = vmul.f32 %v58, %v64
    %v68 = vld [vmem:[%s2] sm:$0x1]
    %v70 = vlaneseq
    %v71 = vshrl.u32 %v70, 7
    %v72 = vsub.s32 0, %v71
    %v73 = vrot.slane %v68, %v72
    %v75 = vadd.f32 %v66, %v73
    %v76 = vadd.f32 %v67, %v73
    %v77 = vpack.c.bf16 %v76, %v75
    %v79 = vunpack.c.l.b16 %v77
    %v80 = vunpack.c.h.b16 %v77
    %v81 = vpack.c.b16 %v79, %v79
    %v82 = vpack.c.b16 %v80, %v80
    %vm85 = vcmask 257024
    %86 = vst.msk [vmem:[#allocation5] sm:$0xf] %vm85, %v81
    %87 = vst.msk [vmem:[#allocation5 + $0x4] sm:$0xf] %vm85, %v82
    // Predicated region
    $region18: #{tpu_custom_call.1} parent=1 // pred_check
      _
    $region19: #{tpu_custom_call.1} parent=1 // pred_check_branch
      %89 = sbr.rel (0) target = $region21
    $region20: #{tpu_custom_call.1} parent=1 // pred_region
      %s91 = ssub.s32 128, 128
      %92 = vsyncadd [#allocation4], %s91
      %s93 = sshll.u32 [#allocation5], 4
      %s94 = int_to_ptr.vmem [resolvable:$true] %s93
      %99 = dma.vmem_to_hbm [thread:$0]  %s94, 128, %s3, [#allocation4], 64, 64, 4
    $region21: #{tpu_custom_call.1} parent=1 // pred_fallthru
      _
    // Predicated region
    $region22: #{tpu_custom_call.1} parent=1 // pred_check
      _
    $region23: #{tpu_custom_call.1} parent=1 // pred_check_branch
      %101 = sbr.rel (0) target = $region25
    $region24: #{tpu_custom_call.1} parent=1 // pred_region
      %102 = dma.done [#allocation4], 128
    $region25: #{tpu_custom_call.1} parent=1 // pred_fallthru
      _
    %103 = vsyncpa [#allocation3], 1
    %104 = vsyncpa [#allocation4], 1

</llo_original>
